<compile_context>
chip_gen: v7x
topology: tpu7x:2x2x1
jax: 0.10.0
libtpu: 0.0.40
codegen_flags: <defaults>
</compile_context>

<pallas_src>
import functools

import jax
import jax.numpy as jnp
from jax.experimental import pallas as pl
from jax.experimental.pallas import tpu as pltpu


# ---------------------------------------------------------------------------
# Kernel 1: synthetic "affineNet" regressor (pool + linear).  The identity
# blend / divider scaling are pre-folded into w/b by the wrapper.
# ---------------------------------------------------------------------------
def _affine_regressor_kernel(src_ref, tgt_ref, w_ref, b_ref, out_ref):
    # src/tgt: (B, C, HW); w: (2C, 6) pre-scaled; b: (1, 6) pre-blended.
    C = src_ref.shape[1]
    fs = jnp.mean(src_ref[...], axis=2)            # (B, C) global-average-pool
    ft = jnp.mean(tgt_ref[...], axis=2)            # (B, C)
    raw = b_ref[...]                               # (1, 6)
    # C is tiny for this placeholder regressor -> unroll the contraction so
    # everything stays 2D rank-1 updates on the VPU (no tiny-dim MXU matmul).
    for c in range(C):
        raw = raw + fs[:, c:c + 1] * w_ref[c:c + 1, :]
        raw = raw + ft[:, c:c + 1] * w_ref[C + c:C + c + 1, :]
    out_ref[...] = jnp.broadcast_to(raw, out_ref.shape)


def affine_regressor(src_flat, tgt_flat, w, b, divider):
    B = src_flat.shape[0]
    # Fold  (raw + divider*I) / (divider+1)  into the linear layer itself:
    #   w_eff = w / (divider+1);  b_eff = (b + divider*I) / (divider+1)
    identity_row = jnp.array([[1.0, 0.0, 0.0, 0.0, 1.0, 0.0]], jnp.float32)
    scale = 1.0 / (float(divider) + 1.0)
    w_eff = w.astype(jnp.float32) * scale
    b_eff = (b.astype(jnp.float32) + float(divider) * identity_row) * scale

    return pl.pallas_call(
        _affine_regressor_kernel,
        out_shape=jax.ShapeDtypeStruct((B, 6), jnp.float32),
        in_specs=[
            pl.BlockSpec(memory_space=pltpu.MemorySpace.VMEM),
            pl.BlockSpec(memory_space=pltpu.MemorySpace.VMEM),
            pl.BlockSpec(memory_space=pltpu.MemorySpace.VMEM),
            pl.BlockSpec(memory_space=pltpu.MemorySpace.VMEM),
        ],
        out_specs=pl.BlockSpec(memory_space=pltpu.MemorySpace.VMEM),
    )(src_flat, tgt_flat, w_eff, b_eff)


# ---------------------------------------------------------------------------
# Kernel 2: affine_grid + grid_sample (bilinear, zeros padding,
#           align_corners=False) -- the hot path, tiled over output pixels.
# ---------------------------------------------------------------------------
def _warp_kernel(theta_ref, img_ref, out_ref, *, H, W, tile_n, matmul_dtype):
    b = pl.program_id(0)
    n = pl.program_id(1)
    HW = H * W

    base = b * 6
    t00 = theta_ref[base + 0]
    t01 = theta_ref[base + 1]
    t02 = theta_ref[base + 2]
    t10 = theta_ref[base + 3]
    t11 = theta_ref[base + 4]
    t12 = theta_ref[base + 5]

    # Flattened output-pixel indices covered by this tile: (1, tile_n)
    p = n * tile_n + jax.lax.broadcasted_iota(jnp.int32, (1, tile_n), 1)
    jj = (p % W).astype(jnp.float32)
    ii = (p // W).astype(jnp.float32)

    # F.affine_grid base grid, align_corners=False
    xb = (2.0 * jj + 1.0) / W - 1.0
    yb = (2.0 * ii + 1.0) / H - 1.0
    xs = t00 * xb + t01 * yb + t02
    ys = t10 * xb + t11 * yb + t12

    # F.grid_sample unnormalize, align_corners=False
    ix = ((xs + 1.0) * W - 1.0) * 0.5
    iy = ((ys + 1.0) * H - 1.0) * 0.5

    x0f = jnp.floor(ix)
    y0f = jnp.floor(iy)
    fx = ix - x0f
    fy = iy - y0f
    x0 = x0f.astype(jnp.int32)
    y0 = y0f.astype(jnp.int32)
    x1 = x0 + 1
    y1 = y0 + 1

    # Per-corner validity (zeros padding): invalid corners get weight 0.
    vx0 = ((x0 >= 0) & (x0 <= W - 1)).astype(jnp.float32)
    vx1 = ((x1 >= 0) & (x1 <= W - 1)).astype(jnp.float32)
    vy0 = ((y0 >= 0) & (y0 <= H - 1)).astype(jnp.float32)
    vy1 = ((y1 >= 0) & (y1 <= H - 1)).astype(jnp.float32)

    w00 = (1.0 - fx) * (1.0 - fy) * vx0 * vy0      # corner (x0, y0)
    w01 = fx * (1.0 - fy) * vx1 * vy0              # corner (x1, y0)
    w10 = (1.0 - fx) * fy * vx0 * vy1              # corner (x0, y1)
    w11 = fx * fy * vx1 * vy1                      # corner (x1, y1)

    # Unclamped flat index of the (x0, y0) corner.  The other 3 corners sit at
    # fixed offsets +1, +W, +W+1, so a single nested select over d = q - idx00
    # builds the whole one-hot mixing block in one pass (no 4 separate
    # compare/select passes, no 4 live (HW, tile_n) temporaries).  Invalid /
    # out-of-range corners are already weight-zeroed above, so wrong row hits
    # from flat-index wrap contribute nothing (offsets are distinct for W>=2).
    idx00 = y0 * W + x0                            # (1, tile_n) int32
    q = jax.lax.broadcasted_iota(jnp.int32, (HW, tile_n), 0)
    d = q - idx00                                  # (HW, tile_n)
    m = jnp.where(d == 0, w00,
        jnp.where(d == 1, w01,
        jnp.where(d == W, w10,
        jnp.where(d == W + 1, w11, 0.0))))         # (HW, tile_n) f32

    img = img_ref[0]                               # (C_pad, HW_in)
    out = jnp.dot(img.astype(matmul_dtype), m.astype(matmul_dtype),
                  preferred_element_type=jnp.float32)  # (C_pad, tile_n)
    out_ref[0] = out.astype(out_ref.dtype)


def _pick_tile_n(hw, max_m_bytes=4 << 20):
    """Largest output-pixel tile that (a) keeps stores lane-dense (multiple of
    128), (b) divides HW, (c) keeps the (HW, tile) f32 one-hot block small
    enough that scratch + intermediates fit comfortably in v7x's 64 MiB VMEM."""
    if hw <= 128 or hw % 128 != 0:
        return hw                                   # tiny/odd size: one tile
    best = 128
    cand = 128
    while cand <= min(hw, 2048):
        if hw % cand == 0 and hw * cand * 4 <= max_m_bytes:
            best = cand
        cand += 128
    return best


def affine_warp(theta_flat1d, img_flat, H, W, *, tile_n=None,
                matmul_dtype=jnp.float32):
    # matmul_dtype=jnp.bfloat16 is a v6e/v7x throughput option (f32 accum kept
    # via preferred_element_type); default f32 for bit-faithful grid_sample.
    B, C, HW = img_flat.shape
    assert HW == H * W
    if tile_n is None:
        tile_n = _pick_tile_n(HW)
    assert HW % tile_n == 0 and (tile_n % 128 == 0 or tile_n == HW)
    num_tiles = HW // tile_n

    # Pad channels to a sublane multiple so the MXU LHS is (8k, HW) aligned.
    c_pad = -(-C // 8) * 8
    if c_pad != C:
        img_flat = jnp.pad(img_flat, ((0, 0), (0, c_pad - C), (0, 0)))

    # VMEM budget: one-hot block + ~3 same-size intermediates, double-buffered
    # image and output blocks.  Stay inside the v7x 64 MiB physical budget.
    m_bytes = HW * tile_n * 4
    vmem_need = (4 * m_bytes + 2 * c_pad * HW * 4 + 2 * c_pad * tile_n * 4
                 + (2 << 20))
    vmem_limit = int(min(max(vmem_need, 32 << 20), 60 << 20))

    kernel = functools.partial(_warp_kernel, H=H, W=W, tile_n=tile_n,
                               matmul_dtype=matmul_dtype)
    out = pl.pallas_call(
        kernel,
        out_shape=jax.ShapeDtypeStruct((B, c_pad, HW), jnp.float32),
        grid=(B, num_tiles),
        in_specs=[
            pl.BlockSpec(memory_space=pltpu.MemorySpace.SMEM),   # theta (B*6,)
            pl.BlockSpec((1, c_pad, HW), lambda b, n: (b, 0, 0)),  # full image
        ],
        out_specs=pl.BlockSpec((1, c_pad, tile_n), lambda b, n: (b, 0, n)),
        compiler_params=pltpu.CompilerParams(
            dimension_semantics=("parallel", "parallel"),
            vmem_limit_bytes=vmem_limit),
    )(theta_flat1d, img_flat)
    return out[:, :C, :]


# ---------------------------------------------------------------------------
# Pure-JAX reference for the warp (used only for the self-check in __main__).
# ---------------------------------------------------------------------------
def _warp_reference(img, theta, H, W):
    B, C = img.shape[:2]
    ii, jj = jnp.meshgrid(jnp.arange(H, dtype=jnp.float32),
                          jnp.arange(W, dtype=jnp.float32), indexing="ij")
    xb = (2.0 * jj + 1.0) / W - 1.0
    yb = (2.0 * ii + 1.0) / H - 1.0
    xs = (theta[:, 0, 0, None, None] * xb + theta[:, 0, 1, None, None] * yb
          + theta[:, 0, 2, None, None])
    ys = (theta[:, 1, 0, None, None] * xb + theta[:, 1, 1, None, None] * yb
          + theta[:, 1, 2, None, None])
    ix = ((xs + 1.0) * W - 1.0) * 0.5
    iy = ((ys + 1.0) * H - 1.0) * 0.5
    x0 = jnp.floor(ix)
    y0 = jnp.floor(iy)
    fx = ix - x0
    fy = iy - y0

    def corner(xc, yc):
        v = ((xc >= 0) & (xc <= W - 1) & (yc >= 0) & (yc <= H - 1))
        v = v.astype(img.dtype)
        xi = jnp.clip(xc, 0, W - 1).astype(jnp.int32)
        yi = jnp.clip(yc, 0, H - 1).astype(jnp.int32)
        idx = jnp.broadcast_to((yi * W + xi)[:, None, :, :].reshape(B, 1, H * W),
                               (B, C, H * W))
        g = jnp.take_along_axis(img.reshape(B, C, H * W), idx, axis=2)
        return g.reshape(B, C, H, W) * v[:, None]

    return (corner(x0, y0) * ((1 - fx) * (1 - fy))[:, None]
            + corner(x0 + 1, y0) * (fx * (1 - fy))[:, None]
            + corner(x0, y0 + 1) * ((1 - fx) * fy)[:, None]
            + corner(x0 + 1, y0 + 1) * (fx * fy)[:, None])


# ---------------------------------------------------------------------------
# Full SP_DHR_Net.forward
# ---------------------------------------------------------------------------
def sp_dhr_forward(source, target, points, params, divider=1.0, tile_n=None):
    B, C, H, W = source.shape
    src_flat = source.reshape(B, C, H * W)
    tgt_flat = target.reshape(B, C, H * W)

    # 1+2. affineNet (synthetic, deterministic); identity blend folded into
    #      the regressor weights in the wrapper.
    theta = affine_regressor(src_flat, tgt_flat, params["w"], params["b"],
                             divider)                       # (B, 6)
    affine_params = theta.reshape(B, 2, 3)

    # 3. tensor_affine_transform (affine_grid + bilinear grid_sample, zeros).
    warped_flat = affine_warp(theta.reshape(B * 6), src_flat, H, W,
                              tile_n=tile_n)
    transformed_source_image = warped_flat.reshape(B, C, H, W)

    # 4. transform_points_DVF on points[0].T (batch-0 affine).  Only N points;
    #    plain jnp avoids a padded, masked-store Pallas launch for 8 values.
    pts = points[0]                                         # (N, 2) = (x, y)
    t = affine_params[0]
    xn = (2.0 * pts[:, 0] + 1.0) / W - 1.0
    yn = (2.0 * pts[:, 1] + 1.0) / H - 1.0
    xs = t[0, 0] * xn + t[0, 1] * yn + t[0, 2]
    ys = t[1, 0] * xn + t[1, 1] * yn + t[1, 2]
    xp = ((xs + 1.0) * W - 1.0) * 0.5
    yp = ((ys + 1.0) * H - 1.0) * 0.5
    transformed_points = jnp.stack([xp, yp], axis=1)        # (N, 2)

    return transformed_source_image, affine_params, transformed_points


if __name__ == "__main__":
    key = jax.random.PRNGKey(0)
    k1, k2, k3, k4 = jax.random.split(key, 4)

    B, C, H, W, N = 2, 4, 16, 16, 8
    source = jax.random.normal(k1, (B, C, H, W), jnp.float32)
    target = jax.random.normal(k2, (B, C, H, W), jnp.float32)
    points = jax.random.uniform(
        k3, (1, N, 2), jnp.float32, minval=0.0, maxval=float(H - 1))

    # Deterministic synthetic "affineNet" parameters (small -> near-identity
    # affine after blending with the identity).
    params = {
        "w": 0.02 * jax.random.normal(k4, (2 * C, 6), jnp.float32),
        "b": jnp.zeros((1, 6), jnp.float32),
    }

    # tile_n=128 exercises the multi-tile (batch x pixel-tile) grid: (2, 2).
    warped, theta, pts = sp_dhr_forward(source, target, points, params,
                                        divider=1.0, tile_n=128)
    jax.block_until_ready((warped, theta, pts))

    assert warped.shape == (B, C, H, W)
    assert theta.shape == (B, 2, 3)
    assert pts.shape == (N, 2)
    assert bool(jnp.all(jnp.isfinite(warped)))

    # Self-check of the hot-path warp kernel against a pure-JAX reference of
    # affine_grid + grid_sample (bilinear, zeros, align_corners=False).
    ref = _warp_reference(source, theta, H, W)
    err = float(jnp.max(jnp.abs(ref - warped)))
    assert err < 1e-4, f"warp mismatch vs reference: {err}"

    print("KERNEL_OK")
</pallas_src>

<mosaic_0001>
module attributes {stable_mosaic.version = 11 : i64} {
  func.func @_affine_regressor_kernel(%arg0: memref<2x4x256xf32, #tpu.memory_space<vmem>>, %arg1: memref<2x4x256xf32, #tpu.memory_space<vmem>>, %arg2: memref<8x6xf32, #tpu.memory_space<vmem>>, %arg3: memref<1x6xf32, #tpu.memory_space<vmem>>, %arg4: memref<2x6xf32, #tpu.memory_space<vmem>>) attributes {dimension_semantics = [], scalar_prefetch = 0 : i64, scratch_operands = 0 : i64, tpu.core_type = #tpu.core_type<tc>} {
    %c0 = arith.constant 0 : index
    %c0_0 = arith.constant 0 : index
    %c0_1 = arith.constant 0 : index
    %0 = vector.load %arg0[%c0, %c0_0, %c0_1] : memref<2x4x256xf32, #tpu.memory_space<vmem>>, vector<2x4x256xf32>
    %cst = arith.constant dense<0.000000e+00> : vector<2x4xf32>
    %1 = vector.multi_reduction <add>, %0, %cst [2] : vector<2x4x256xf32> to vector<2x4xf32>
    %cst_2 = arith.constant 2.560000e+02 : f32
    %2 = vector.broadcast %cst_2 : f32 to vector<2x4xf32>
    %3 = arith.divf %1, %2 : vector<2x4xf32>
    %c0_3 = arith.constant 0 : index
    %c0_4 = arith.constant 0 : index
    %c0_5 = arith.constant 0 : index
    %4 = vector.load %arg1[%c0_3, %c0_4, %c0_5] : memref<2x4x256xf32, #tpu.memory_space<vmem>>, vector<2x4x256xf32>
    %cst_6 = arith.constant dense<0.000000e+00> : vector<2x4xf32>
    %5 = vector.multi_reduction <add>, %4, %cst_6 [2] : vector<2x4x256xf32> to vector<2x4xf32>
    %cst_7 = arith.constant 2.560000e+02 : f32
    %6 = vector.broadcast %cst_7 : f32 to vector<2x4xf32>
    %7 = arith.divf %5, %6 : vector<2x4xf32>
    %c0_8 = arith.constant 0 : index
    %c0_9 = arith.constant 0 : index
    %8 = vector.load %arg3[%c0_8, %c0_9] : memref<1x6xf32, #tpu.memory_space<vmem>>, vector<1x6xf32>
    %9 = vector.extract_strided_slice %3 {offsets = [0, 0], sizes = [2, 1], strides = [1, 1]} : vector<2x4xf32> to vector<2x1xf32>
    %c0_10 = arith.constant 0 : index
    %c0_11 = arith.constant 0 : index
    %10 = vector.load %arg2[%c0_10, %c0_11] : memref<8x6xf32, #tpu.memory_space<vmem>>, vector<1x6xf32>
    %11 = vector.broadcast %9 : vector<2x1xf32> to vector<2x6xf32>
    %12 = vector.broadcast %10 : vector<1x6xf32> to vector<2x6xf32>
    %13 = arith.mulf %11, %12 : vector<2x6xf32>
    %14 = vector.broadcast %8 : vector<1x6xf32> to vector<2x6xf32>
    %15 = arith.addf %14, %13 : vector<2x6xf32>
    %16 = vector.extract_strided_slice %7 {offsets = [0, 0], sizes = [2, 1], strides = [1, 1]} : vector<2x4xf32> to vector<2x1xf32>
    %c4 = arith.constant 4 : index
    %c0_12 = arith.constant 0 : index
    %17 = vector.load %arg2[%c4, %c0_12] : memref<8x6xf32, #tpu.memory_space<vmem>>, vector<1x6xf32>
    %18 = vector.broadcast %16 : vector<2x1xf32> to vector<2x6xf32>
    %19 = vector.broadcast %17 : vector<1x6xf32> to vector<2x6xf32>
    %20 = arith.mulf %18, %19 : vector<2x6xf32>
    %21 = arith.addf %15, %20 : vector<2x6xf32>
    %22 = vector.extract_strided_slice %3 {offsets = [0, 1], sizes = [2, 1], strides = [1, 1]} : vector<2x4xf32> to vector<2x1xf32>
    %c1 = arith.constant 1 : index
    %c0_13 = arith.constant 0 : index
    %23 = vector.load %arg2[%c1, %c0_13] : memref<8x6xf32, #tpu.memory_space<vmem>>, vector<1x6xf32>
    %24 = vector.broadcast %22 : vector<2x1xf32> to vector<2x6xf32>
    %25 = vector.broadcast %23 : vector<1x6xf32> to vector<2x6xf32>
    %26 = arith.mulf %24, %25 : vector<2x6xf32>
    %27 = arith.addf %21, %26 : vector<2x6xf32>
    %28 = vector.extract_strided_slice %7 {offsets = [0, 1], sizes = [2, 1], strides = [1, 1]} : vector<2x4xf32> to vector<2x1xf32>
    %c5 = arith.constant 5 : index
    %c0_14 = arith.constant 0 : index
    %29 = vector.load %arg2[%c5, %c0_14] : memref<8x6xf32, #tpu.memory_space<vmem>>, vector<1x6xf32>
    %30 = vector.broadcast %28 : vector<2x1xf32> to vector<2x6xf32>
    %31 = vector.broadcast %29 : vector<1x6xf32> to vector<2x6xf32>
    %32 = arith.mulf %30, %31 : vector<2x6xf32>
    %33 = arith.addf %27, %32 : vector<2x6xf32>
    %34 = vector.extract_strided_slice %3 {offsets = [0, 2], sizes = [2, 1], strides = [1, 1]} : vector<2x4xf32> to vector<2x1xf32>
    %c2 = arith.constant 2 : index
    %c0_15 = arith.constant 0 : index
    %35 = vector.load %arg2[%c2, %c0_15] : memref<8x6xf32, #tpu.memory_space<vmem>>, vector<1x6xf32>
    %36 = vector.broadcast %34 : vector<2x1xf32> to vector<2x6xf32>
    %37 = vector.broadcast %35 : vector<1x6xf32> to vector<2x6xf32>
    %38 = arith.mulf %36, %37 : vector<2x6xf32>
    %39 = arith.addf %33, %38 : vector<2x6xf32>
    %40 = vector.extract_strided_slice %7 {offsets = [0, 2], sizes = [2, 1], strides = [1, 1]} : vector<2x4xf32> to vector<2x1xf32>
    %c6 = arith.constant 6 : index
    %c0_16 = arith.constant 0 : index
    %41 = vector.load %arg2[%c6, %c0_16] : memref<8x6xf32, #tpu.memory_space<vmem>>, vector<1x6xf32>
    %42 = vector.broadcast %40 : vector<2x1xf32> to vector<2x6xf32>
    %43 = vector.broadcast %41 : vector<1x6xf32> to vector<2x6xf32>
    %44 = arith.mulf %42, %43 : vector<2x6xf32>
    %45 = arith.addf %39, %44 : vector<2x6xf32>
    %46 = vector.extract_strided_slice %3 {offsets = [0, 3], sizes = [2, 1], strides = [1, 1]} : vector<2x4xf32> to vector<2x1xf32>
    %c3 = arith.constant 3 : index
    %c0_17 = arith.constant 0 : index
    %47 = vector.load %arg2[%c3, %c0_17] : memref<8x6xf32, #tpu.memory_space<vmem>>, vector<1x6xf32>
    %48 = vector.broadcast %46 : vector<2x1xf32> to vector<2x6xf32>
    %49 = vector.broadcast %47 : vector<1x6xf32> to vector<2x6xf32>
    %50 = arith.mulf %48, %49 : vector<2x6xf32>
    %51 = arith.addf %45, %50 : vector<2x6xf32>
    %52 = vector.extract_strided_slice %7 {offsets = [0, 3], sizes = [2, 1], strides = [1, 1]} : vector<2x4xf32> to vector<2x1xf32>
    %c7 = arith.constant 7 : index
    %c0_18 = arith.constant 0 : index
    %53 = vector.load %arg2[%c7, %c0_18] : memref<8x6xf32, #tpu.memory_space<vmem>>, vector<1x6xf32>
    %54 = vector.broadcast %52 : vector<2x1xf32> to vector<2x6xf32>
    %55 = vector.broadcast %53 : vector<1x6xf32> to vector<2x6xf32>
    %56 = arith.mulf %54, %55 : vector<2x6xf32>
    %57 = arith.addf %51, %56 : vector<2x6xf32>
    %c0_19 = arith.constant 0 : index
    %c0_20 = arith.constant 0 : index
    %58 = vector.load %arg4[%c0_19, %c0_20] : memref<2x6xf32, #tpu.memory_space<vmem>>, vector<2x6xf32>
    tpu.vector_store %arg4[%c0_19, %c0_20], %57 {strides = array<i32>} : memref<2x6xf32, #tpu.memory_space<vmem>>, vector<2x6xf32>,
    return
  }
}

</mosaic_0001>

<llo_original>
// kernel: tpu_custom_call.1
$region0: #{tpu_custom_call.1}
  #allocation0 [shape = 'u32[]', space=smem, size = 0x4, offset = 0x4, fixed_abs, tag = 'smem constant byte address 0x4 - core index']
  #allocation1 [shape = 'u32[144,128]{1,0:T(1,128)}', space=vmem, size = 0x12000, scoped, tag = 'internal scratch']
  %s0 = inlined_call_operand.hbm [shape: f32[2,4,256], index: 0, kind: input, shape index: {}]
  %s1 = inlined_call_operand.hbm [shape: f32[2,4,256], index: 1, kind: input, shape index: {}]
  %s2 = inlined_call_operand.hbm [shape: f32[8,6], index: 2, kind: input, shape index: {}]
  %s3 = inlined_call_operand.vmem [shape: f32[1,6], index: 3, kind: input, shape index: {}]
  %s4 = inlined_call_operand.hbm [shape: f32[2,6], index: 4, kind: output, shape index: {}]
  %s5 = sld [smem:[#allocation0]]
  $region38: #{tpu_custom_call.1} parent=0
    _
  %s7 = ssub.s32 1, %s5
  %s8 = scalar_select 0, %s7, %s5
  $region1: #{tpu_custom_call.1} parent=0
    #allocation2 [shape = 'u8[8192]{0}', space=vmem, size = 0x2000, scoped, tag = 'input window, operand 0, single buffered']
    #allocation3 [shape = 's32[1]{0}', space=sflag, size = 0x4, scoped, tag = 'scoped memory for tpu_custom_call.1']
    #allocation4 [shape = 's32[1]{0}', space=sflag, size = 0x4, scoped, tag = 'scoped memory for tpu_custom_call.1']
    #allocation5 [shape = 'u8[8192]{0}', space=vmem, size = 0x2000, scoped, tag = 'input window, operand 1, single buffered']
    #allocation6 [shape = 's32[1]{0}', space=sflag, size = 0x4, scoped, tag = 'scoped memory for tpu_custom_call.1']
    #allocation7 [shape = 'u8[4096]{0}', space=vmem, size = 0x1000, scoped, tag = 'input window, operand 2, single buffered']
    #allocation8 [shape = 'u8[1024]{0}', space=vmem, size = 0x400, scoped, tag = 'output window, operand 0, single buffered']
    %9 = vsyncpa [#allocation3], 0
    %10 = vsyncpa [#allocation6], 0
    %11 = vsyncpa [#allocation4], 0
    // Predicated region
    $region2: #{tpu_custom_call.1} parent=1 // pred_check
      _
    $region3: #{tpu_custom_call.1} parent=1 // pred_check_branch
      %13 = sbr.rel (0) target = $region5
    $region4: #{tpu_custom_call.1} parent=1 // pred_region
      %s15 = ssub.s32 256, 256
      %16 = vsyncadd [#allocation3], %s15
      %s17 = sshll.u32 [#allocation2], 4
      %s18 = int_to_ptr.vmem [resolvable:$true] %s17
      %23 = dma.hbm_to_vmem [thread:$0]  %s0, 256, %s18, [#allocation3], 128, 128, 8
    $region5: #{tpu_custom_call.1} parent=1 // pred_fallthru
      _
    // Predicated region
    $region6: #{tpu_custom_call.1} parent=1 // pred_check
      _
    $region7: #{tpu_custom_call.1} parent=1 // pred_check_branch
      %25 = sbr.rel (0) target = $region9
    $region8: #{tpu_custom_call.1} parent=1 // pred_region
      %s27 = ssub.s32 256, 256
      %28 = vsyncadd [#allocation6], %s27
      %s29 = sshll.u32 [#allocation5], 4
      %s30 = int_to_ptr.vmem [resolvable:$true] %s29
      %35 = dma.hbm_to_vmem [thread:$0]  %s1, 256, %s30, [#allocation6], 128, 128, 8
    $region9: #{tpu_custom_call.1} parent=1 // pred_fallthru
      _
    // Predicated region
    $region10: #{tpu_custom_call.1} parent=1 // pred_check
      _
    $region11: #{tpu_custom_call.1} parent=1 // pred_check_branch
      %37 = sbr.rel (0) target = $region13
    $region12: #{tpu_custom_call.1} parent=1 // pred_region
      %s39 = ssub.s32 128, 128
      %40 = vsyncadd [#allocation6], %s39
      %s42 = sshll.u32 [#allocation7], 4
      %s43 = int_to_ptr.vmem [resolvable:$true] %s42
      %45 = dma.hbm_to_vmem [thread:$0]  %s2, 128, %s43, [#allocation6]
    $region13: #{tpu_custom_call.1} parent=1 // pred_fallthru
      _
    // Predicated region
    $region14: #{tpu_custom_call.1} parent=1 // pred_check
      _
    $region15: #{tpu_custom_call.1} parent=1 // pred_check_branch
      %47 = sbr.rel (0) target = $region17
    $region16: #{tpu_custom_call.1} parent=1 // pred_region
      _
    $region17: #{tpu_custom_call.1} parent=1 // pred_fallthru
      _
    // Predicated region
    $region18: #{tpu_custom_call.1} parent=1 // pred_check
      _
    $region19: #{tpu_custom_call.1} parent=1 // pred_check_branch
      %49 = sbr.rel (0) target = $region21
    $region20: #{tpu_custom_call.1} parent=1 // pred_region
      %50 = dma.done [#allocation3], 256
    $region21: #{tpu_custom_call.1} parent=1 // pred_fallthru
      _
    // Predicated region
    $region22: #{tpu_custom_call.1} parent=1 // pred_check
      _
    $region23: #{tpu_custom_call.1} parent=1 // pred_check_branch
      %52 = sbr.rel (0) target = $region25
    $region24: #{tpu_custom_call.1} parent=1 // pred_region
      %53 = dma.done [#allocation6], 256
    $region25: #{tpu_custom_call.1} parent=1 // pred_fallthru
      _
    // Predicated region
    $region26: #{tpu_custom_call.1} parent=1 // pred_check
      _
    $region27: #{tpu_custom_call.1} parent=1 // pred_check_branch
      %55 = sbr.rel (0) target = $region29
    $region28: #{tpu_custom_call.1} parent=1 // pred_region
      %56 = dma.done [#allocation6], 128
    $region29: #{tpu_custom_call.1} parent=1 // pred_fallthru
      _
    %v57 = vld [vmem:[#allocation2] sm:$0xff]
    %v58 = vld [vmem:[#allocation2 + $0x8] sm:$0xff]
    %v61 = vcombine.high %v57, %v57
    %v62 = vcombine.high %v58, %v58
    %vm65 = vcmask 1043456
    %v66 = vsel %vm65, %v57, 0.0
    %v67 = vsel %vm65, %v61, 0.0
    %v68 = vadd.f32 %v66, %v67
    %69 = vadd.xlane.f32.xlu0 %v68
    %v70 = vpop.xlane.xlu0 %69
    %v71 = vsel %vm65, %v58, 0.0
    %v72 = vsel %vm65, %v62, 0.0
    %v73 = vadd.f32 %v71, %v72
    %74 = vadd.xlane.f32.xlu0 %v73
    %v75 = vpop.xlane.xlu0 %74
    %v76 = vrcp.pop 256.0
    %v77 = vmul.f32 %v70, %v76
    %v78 = vmul.f32 %v75, %v76
    %v79 = vld [vmem:[#allocation5] sm:$0xff]
    %v80 = vld [vmem:[#allocation5 + $0x8] sm:$0xff]
    %v83 = vcombine.high %v79, %v79
    %v84 = vcombine.high %v80, %v80
    %v87 = vsel %vm65, %v79, 0.0
    %v88 = vsel %vm65, %v83, 0.0
    %v89 = vadd.f32 %v87, %v88
    %90 = vadd.xlane.f32.xlu0 %v89
    %v91 = vpop.xlane.xlu0 %90
    %v92 = vsel %vm65, %v80, 0.0
    %v93 = vsel %vm65, %v84, 0.0
    %v94 = vadd.f32 %v92, %v93
    %95 = vadd.xlane.f32.xlu0 %v94
    %v96 = vpop.xlane.xlu0 %95
    %v97 = vmul.f32 %v91, %v76
    %v98 = vmul.f32 %v96, %v76
    %v99 = vld [vmem:[%s3] sm:$0x1]
    %v100 = vld [vmem:[#allocation7] sm:$0x1]
    %v101 = vlaneseq
    %v102 = vshrl.u32 %v101, 7
    %v103 = vsub.s32 0, %v102
    %v104 = vrot.slane %v77, %v103
    %v105 = vlaneseq
    %v106 = vshrl.u32 %v105, 7
    %v107 = vsub.s32 0, %v106
    %v108 = vrot.slane %v78, %v107
    %v109 = vlaneseq
    %v110 = vshrl.u32 %v109, 7
    %v111 = vsub.s32 0, %v110
    %v112 = vrot.slane %v100, %v111
    %115 = vbcast.lane.b32.xlu0 %v112, 256
    %v116 = vpop.permute.xlu0 %115
    %v118 = vmul.f32 %v104, %v116
    %v119 = vmul.f32 %v108, %v116
    %v121 = vlaneseq
    %v122 = vshrl.u32 %v121, 7
    %v123 = vsub.s32 0, %v122
    %v124 = vrot.slane %v99, %v123
    %128 = vset.pattern.permute.xlu0 0
    %129 = vperm.xlu0 %128, %v118
    %v130 = vpop.permute.xlu0 %129
    %131 = vset.pattern.permute.xlu0 0
    %132 = vperm.xlu0 %131, %v119
    %v133 = vpop.permute.xlu0 %132
    %v134 = vlaneseq
    %v135 = vand.u32 %v134, 127
    %v136 = vlaneseq
    %v137 = vshrl.u32 %v136, 7
    %v138 = vsub.s32 %v135, %v137
    %v139 = vrot.slane %v130, %v138
    %v140 = vlaneseq
    %v141 = vshrl.u32 %v140, 7
    %v142 = vsub.s32 %v135, %v141
    %v143 = vrot.slane %v133, %v142
    %vm144 = vcmask 1041409
    %v145 = vsel %vm144, %v143, %v139
    %v147 = vadd.f32 %v124, %v145
    %v148 = vld [vmem:[#allocation7 + $0x4] sm:$0x1]
    %v149 = vlaneseq
    %v150 = vshrl.u32 %v149, 7
    %v151 = vsub.s32 0, %v150
    %v152 = vrot.slane %v97, %v151
    %v153 = vlaneseq
    %v154 = vshrl.u32 %v153, 7
    %v155 = vsub.s32 0, %v154
    %v156 = vrot.slane %v98, %v155
    %v157 = vlaneseq
    %v158 = vshrl.u32 %v157, 7
    %v159 = vsub.s32 0, %v158
    %v160 = vrot.slane %v148, %v159
    %163 = vbcast.lane.b32.xlu0 %v160, 256
    %v164 = vpop.permute.xlu0 %163
    %v166 = vmul.f32 %v152, %v164
    %v167 = vmul.f32 %v156, %v164
    %170 = vset.pattern.permute.xlu0 0
    %171 = vperm.xlu0 %170, %v166
    %v172 = vpop.permute.xlu0 %171
    %173 = vset.pattern.permute.xlu0 0
    %174 = vperm.xlu0 %173, %v167
    %v175 = vpop.permute.xlu0 %174
    %v176 = vlaneseq
    %v177 = vshrl.u32 %v176, 7
    %v178 = vsub.s32 %v135, %v177
    %v179 = vrot.slane %v172, %v178
    %v180 = vlaneseq
    %v181 = vshrl.u32 %v180, 7
    %v182 = vsub.s32 %v135, %v181
    %v183 = vrot.slane %v175, %v182
    %v184 = vsel %vm144, %v183, %v179
    %v186 = vadd.f32 %v147, %v184
    %v187 = vld [vmem:[#allocation7 + $0x1] sm:$0x1]
    %v188 = vlaneseq
    %v189 = vshrl.u32 %v188, 7
    %v190 = vsub.s32 1, %v189
    %v191 = vrot.slane %v77, %v190
    %v192 = vlaneseq
    %v193 = vshrl.u32 %v192, 7
    %v194 = vsub.s32 1, %v193
    %v195 = vrot.slane %v78, %v194
    %v196 = vlaneseq
    %v197 = vshrl.u32 %v196, 7
    %v198 = vsub.s32 0, %v197
    %v199 = vrot.slane %v187, %v198
    %202 = vbcast.lane.b32.xlu0 %v199, 256
    %v203 = vpop.permute.xlu0 %202
    %v205 = vmul.f32 %v191, %v203
    %v206 = vmul.f32 %v195, %v203
    %209 = vset.pattern.permute.xlu0 0
    %210 = vperm.xlu0 %209, %v205
    %v211 = vpop.permute.xlu0 %210
    %212 = vset.pattern.permute.xlu0 0
    %213 = vperm.xlu0 %212, %v206
    %v214 = vpop.permute.xlu0 %213
    %v215 = vlaneseq
    %v216 = vshrl.u32 %v215, 7
    %v217 = vsub.s32 %v135, %v216
    %v218 = vrot.slane %v211, %v217
    %v219 = vlaneseq
    %v220 = vshrl.u32 %v219, 7
    %v221 = vsub.s32 %v135, %v220
    %v222 = vrot.slane %v214, %v221
    %v223 = vsel %vm144, %v222, %v218
    %v225 = vadd.f32 %v186, %v223
    %v226 = vld [vmem:[#allocation7 + $0x5] sm:$0x1]
    %v227 = vlaneseq
    %v228 = vshrl.u32 %v227, 7
    %v229 = vsub.s32 1, %v228
    %v230 = vrot.slane %v97, %v229
    %v231 = vlaneseq
    %v232 = vshrl.u32 %v231, 7
    %v233 = vsub.s32 1, %v232
    %v234 = vrot.slane %v98, %v233
    %v235 = vlaneseq
    %v236 = vshrl.u32 %v235, 7
    %v237 = vsub.s32 0, %v236
    %v238 = vrot.slane %v226, %v237
    %241 = vbcast.lane.b32.xlu0 %v238, 256
    %v242 = vpop.permute.xlu0 %241
    %v244 = vmul.f32 %v230, %v242
    %v245 = vmul.f32 %v234, %v242
    %248 = vset.pattern.permute.xlu0 0
    %249 = vperm.xlu0 %248, %v244
    %v250 = vpop.permute.xlu0 %249
    %251 = vset.pattern.permute.xlu0 0
    %252 = vperm.xlu0 %251, %v245
    %v253 = vpop.permute.xlu0 %252
    %v254 = vlaneseq
    %v255 = vshrl.u32 %v254, 7
    %v256 = vsub.s32 %v135, %v255
    %v257 = vrot.slane %v250, %v256
    %v258 = vlaneseq
    %v259 = vshrl.u32 %v258, 7
    %v260 = vsub.s32 %v135, %v259
    %v261 = vrot.slane %v253, %v260
    %v262 = vsel %vm144, %v261, %v257
    %v264 = vadd.f32 %v225, %v262
    %v265 = vld [vmem:[#allocation7 + $0x2] sm:$0x1]
    %v266 = vlaneseq
    %v267 = vshrl.u32 %v266, 7
    %v268 = vsub.s32 2, %v267
    %v269 = vrot.slane %v77, %v268
    %v270 = vlaneseq
    %v271 = vshrl.u32 %v270, 7
    %v272 = vsub.s32 2, %v271
    %v273 = vrot.slane %v78, %v272
    %v274 = vlaneseq
    %v275 = vshrl.u32 %v274, 7
    %v276 = vsub.s32 0, %v275
    %v277 = vrot.slane %v265, %v276
    %280 = vbcast.lane.b32.xlu0 %v277, 256
    %v281 = vpop.permute.xlu0 %280
    %v283 = vmul.f32 %v269, %v281
    %v284 = vmul.f32 %v273, %v281
    %287 = vset.pattern.permute.xlu0 0
    %288 = vperm.xlu0 %287, %v283
    %v289 = vpop.permute.xlu0 %288
    %290 = vset.pattern.permute.xlu0 0
    %291 = vperm.xlu0 %290, %v284
    %v292 = vpop.permute.xlu0 %291
    %v293 = vlaneseq
    %v294 = vshrl.u32 %v293, 7
    %v295 = vsub.s32 %v135, %v294
    %v296 = vrot.slane %v289, %v295
    %v297 = vlaneseq
    %v298 = vshrl.u32 %v297, 7
    %v299 = vsub.s32 %v135, %v298
    %v300 = vrot.slane %v292, %v299
    %v301 = vsel %vm144, %v300, %v296
    %v303 = vadd.f32 %v264, %v301
    %v304 = vld [vmem:[#allocation7 + $0x6] sm:$0x1]
    %v305 = vlaneseq
    %v306 = vshrl.u32 %v305, 7
    %v307 = vsub.s32 2, %v306
    %v308 = vrot.slane %v97, %v307
    %v309 = vlaneseq
    %v310 = vshrl.u32 %v309, 7
    %v311 = vsub.s32 2, %v310
    %v312 = vrot.slane %v98, %v311
    %v313 = vlaneseq
    %v314 = vshrl.u32 %v313, 7
    %v315 = vsub.s32 0, %v314
    %v316 = vrot.slane %v304, %v315
    %319 = vbcast.lane.b32.xlu0 %v316, 256
    %v320 = vpop.permute.xlu0 %319
    %v322 = vmul.f32 %v308, %v320
    %v323 = vmul.f32 %v312, %v320
    %326 = vset.pattern.permute.xlu0 0
    %327 = vperm.xlu0 %326, %v322
    %v328 = vpop.permute.xlu0 %327
    %329 = vset.pattern.permute.xlu0 0
    %330 = vperm.xlu0 %329, %v323
    %v331 = vpop.permute.xlu0 %330
    %v332 = vlaneseq
    %v333 = vshrl.u32 %v332, 7
    %v334 = vsub.s32 %v135, %v333
    %v335 = vrot.slane %v328, %v334
    %v336 = vlaneseq
    %v337 = vshrl.u32 %v336, 7
    %v338 = vsub.s32 %v135, %v337
    %v339 = vrot.slane %v331, %v338
    %v340 = vsel %vm144, %v339, %v335
    %v342 = vadd.f32 %v303, %v340
    %v343 = vld [vmem:[#allocation7 + $0x3] sm:$0x1]
    %v344 = vlaneseq
    %v345 = vshrl.u32 %v344, 7
    %v346 = vsub.s32 3, %v345
    %v347 = vrot.slane %v77, %v346
    %v348 = vlaneseq
    %v349 = vshrl.u32 %v348, 7
    %v350 = vsub.s32 3, %v349
    %v351 = vrot.slane %v78, %v350
    %v352 = vlaneseq
    %v353 = vshrl.u32 %v352, 7
    %v354 = vsub.s32 0, %v353
    %v355 = vrot.slane %v343, %v354
    %358 = vbcast.lane.b32.xlu0 %v355, 256
    %v359 = vpop.permute.xlu0 %358
    %v361 = vmul.f32 %v347, %v359
    %v362 = vmul.f32 %v351, %v359
    %365 = vset.pattern.permute.xlu0 0
    %366 = vperm.xlu0 %365, %v361
    %v367 = vpop.permute.xlu0 %366
    %368 = vset.pattern.permute.xlu0 0
    %369 = vperm.xlu0 %368, %v362
    %v370 = vpop.permute.xlu0 %369
    %v371 = vlaneseq
    %v372 = vshrl.u32 %v371, 7
    %v373 = vsub.s32 %v135, %v372
    %v374 = vrot.slane %v367, %v373
    %v375 = vlaneseq
    %v376 = vshrl.u32 %v375, 7
    %v377 = vsub.s32 %v135, %v376
    %v378 = vrot.slane %v370, %v377
    %v379 = vsel %vm144, %v378, %v374
    %v381 = vadd.f32 %v342, %v379
    %v382 = vld [vmem:[#allocation7 + $0x7] sm:$0x1]
    %v383 = vlaneseq
    %v384 = vshrl.u32 %v383, 7
    %v385 = vsub.s32 3, %v384
    %v386 = vrot.slane %v97, %v385
    %v387 = vlaneseq
    %v388 = vshrl.u32 %v387, 7
    %v389 = vsub.s32 3, %v388
    %v390 = vrot.slane %v98, %v389
    %v391 = vlaneseq
    %v392 = vshrl.u32 %v391, 7
    %v393 = vsub.s32 0, %v392
    %v394 = vrot.slane %v382, %v393
    %397 = vbcast.lane.b32.xlu0 %v394, 256
    %v398 = vpop.permute.xlu0 %397
    %v400 = vmul.f32 %v386, %v398
    %v401 = vmul.f32 %v390, %v398
    %404 = vset.pattern.permute.xlu0 0
    %405 = vperm.xlu0 %404, %v400
    %v406 = vpop.permute.xlu0 %405
    %407 = vset.pattern.permute.xlu0 0
    %408 = vperm.xlu0 %407, %v401
    %v409 = vpop.permute.xlu0 %408
    %v410 = vlaneseq
    %v411 = vshrl.u32 %v410, 7
    %v412 = vsub.s32 %v135, %v411
    %v413 = vrot.slane %v406, %v412
    %v414 = vlaneseq
    %v415 = vshrl.u32 %v414, 7
    %v416 = vsub.s32 %v135, %v415
    %v417 = vrot.slane %v409, %v416
    %v418 = vsel %vm144, %v417, %v413
    %v420 = vadd.f32 %v381, %v418
    %vm421 = vcmask 41984
    %422 = vst.msk [vmem:[#allocation8] sm:$0x3] %vm421, %v420
    // Predicated region
    $region30: #{tpu_custom_call.1} parent=1 // pred_check
      _
    $region31: #{tpu_custom_call.1} parent=1 // pred_check_branch
      %424 = sbr.rel (0) target = $region33
    $region32: #{tpu_custom_call.1} parent=1 // pred_region
      %s426 = ssub.s32 32, 32
      %427 = vsyncadd [#allocation4], %s426
      %s429 = sshll.u32 [#allocation8], 4
      %s430 = int_to_ptr.vmem [resolvable:$true] %s429
      %432 = dma.vmem_to_hbm [thread:$0]  %s430, 32, %s4, [#allocation4]
    $region33: #{tpu_custom_call.1} parent=1 // pred_fallthru
      _
    // Predicated region
    $region34: #{tpu_custom_call.1} parent=1 // pred_check
      _
    $region35: #{tpu_custom_call.1} parent=1 // pred_check_branch
      %434 = sbr.rel (0) target = $region37
    $region36: #{tpu_custom_call.1} parent=1 // pred_region
      %435 = dma.done [#allocation4], 32
    $region37: #{tpu_custom_call.1} parent=1 // pred_fallthru
      _
    %436 = vsyncpa [#allocation3], 1
    %437 = vsyncpa [#allocation6], 1
    %438 = vsyncpa [#allocation4], 1

</llo_original>
